<compile_context>
chip_gen: v5e
topology: v5e:2x2
jax: 0.10.0
libtpu: 0.0.40
codegen_flags: <defaults>
</compile_context>

<pallas_src>
import jax
import jax.numpy as jnp
from jax import lax
from jax.experimental import pallas as pl
from jax.experimental.pallas import tpu as pltpu


def _mlp_kernel(x_ref,
                w1_ref, b1_ref,
                w2_ref, b2_ref,
                w3_ref, b3_ref,
                w4_ref, b4_ref,
                o_ref):
    # x_ref: (TB, 30) f32, natural layout.  w*_ref: (out, in).  b*_ref: (out, 1).
    x = x_ref[...].astype(jnp.bfloat16)                                      # (TB, 30)

    # Contract the feature axis of BOTH operands: W1 (23,30) . X (TB,30) -> (23, TB).
    # This puts the batch on lanes without any host-side transpose of x.
    h1 = lax.dot_general(w1_ref[...], x, (((1,), (1,)), ((), ())),
                         preferred_element_type=jnp.float32) + b1_ref[...]   # (23, TB)
    h1 = jnp.maximum(h1, 0.0)

    h2 = jnp.dot(w2_ref[...], h1.astype(jnp.bfloat16),
                 preferred_element_type=jnp.float32) + b2_ref[...]           # (15, TB)
    h2 = jnp.maximum(h2, 0.0)

    h3 = jnp.dot(w3_ref[...], h2.astype(jnp.bfloat16),
                 preferred_element_type=jnp.float32) + b3_ref[...]           # (8, TB)
    h3 = jnp.maximum(h3, 0.0)

    # Last layer 8 -> 1: broadcast-multiply by the weight column and sublane-reduce on
    # the VPU/XLU (free bundle slots) instead of pushing a 1-wide contraction on the MXU.
    h4 = jnp.sum(w4_ref[...] * h3, axis=0, keepdims=True) + b4_ref[...]      # (1, TB)

    o_ref[...] = h4.astype(o_ref.dtype)


def net_forward(x, params, *, tb=8192):
    """x: (B, 30) float32. params: list of (w, b), w is (in, out), b is (out,)."""
    (w1, b1), (w2, b2), (w3, b3), (w4, b4) = params
    B, in_dim = x.shape
    out_dim = w4.shape[1]

    # Batch tiling: multiples of 512 (full-width N blocks on 256-wide MXUs), and keep
    # >= 2 grid steps when the batch allows it (megacore sharding on v7x).
    ALIGN = 512
    b_pad = pl.cdiv(B, ALIGN) * ALIGN
    tb = max(ALIGN, (min(tb, b_pad) // ALIGN) * ALIGN)
    if b_pad // tb < 2 and b_pad >= 2 * ALIGN:
        tb = ((b_pad // 2) // ALIGN) * ALIGN
    b_pad = pl.cdiv(b_pad, tb) * tb
    grid = (b_pad // tb,)

    # Only pad when the batch is not already tile-aligned (no extra pass otherwise).
    x_p = x if b_pad == B else jnp.pad(x, ((0, b_pad - B), (0, 0)))

    # Feature-major weights (out, in): bf16 for the MXU layers, f32 for the VPU last layer.
    w1_t = w1.T.astype(jnp.bfloat16)              # (23, 30)
    w2_t = w2.T.astype(jnp.bfloat16)              # (15, 23)
    w3_t = w3.T.astype(jnp.bfloat16)              # (8, 15)
    w4_c = w4.astype(jnp.float32)                 # (8, 1) column, VPU path
    b1_c = b1.reshape(-1, 1).astype(jnp.float32)  # (23, 1)
    b2_c = b2.reshape(-1, 1).astype(jnp.float32)  # (15, 1)
    b3_c = b3.reshape(-1, 1).astype(jnp.float32)  # (8, 1)
    b4_c = b4.reshape(-1, 1).astype(jnp.float32)  # (1, 1)

    # Weights/biases: whole array as one block with a constant index map -> DMA'd once,
    # resident in VMEM across all batch tiles; x/out tiles are auto double-buffered.
    full = lambda a: pl.BlockSpec(a.shape, lambda i: (0,) * a.ndim)

    out_t = pl.pallas_call(
        _mlp_kernel,
        out_shape=jax.ShapeDtypeStruct((out_dim, b_pad), jnp.float32),
        grid=grid,
        in_specs=[pl.BlockSpec((tb, in_dim), lambda i: (i, 0)),
                  full(w1_t), full(b1_c),
                  full(w2_t), full(b2_c),
                  full(w3_t), full(b3_c),
                  full(w4_c), full(b4_c)],
        out_specs=pl.BlockSpec((out_dim, tb), lambda i: (0, i)),
        compiler_params=pltpu.CompilerParams(
            dimension_semantics=("parallel",)),
    )(x_p, w1_t, b1_c, w2_t, b2_c, w3_t, b3_c, w4_c, b4_c)

    # Back to PyTorch's (B, 1) layout (layout-free transpose since one dim is 1),
    # dropping the batch padding.
    return out_t[:, :B].T


def init_params(key):
    # Deterministic init mimicking torch nn.Linear default:
    # U(-1/sqrt(fan_in), 1/sqrt(fan_in)) for both weight and bias.
    dims = [(30, 23), (23, 15), (15, 8), (8, 1)]
    params = []
    for (fan_in, fan_out) in dims:
        key, kw, kb = jax.random.split(key, 3)
        bound = 1.0 / jnp.sqrt(fan_in)
        w = jax.random.uniform(kw, (fan_in, fan_out), jnp.float32, -bound, bound)
        b = jax.random.uniform(kb, (fan_out,), jnp.float32, -bound, bound)
        params.append((w, b))
    return params


def ref_forward_bf16(x, params):
    # Same math / same bf16 casting scheme as the kernel, in plain JAX.
    (w1, b1), (w2, b2), (w3, b3), (w4, b4) = params
    h = jnp.dot(x.astype(jnp.bfloat16), w1.astype(jnp.bfloat16),
                preferred_element_type=jnp.float32) + b1
    h = jnp.maximum(h, 0.0)
    h = jnp.dot(h.astype(jnp.bfloat16), w2.astype(jnp.bfloat16),
                preferred_element_type=jnp.float32) + b2
    h = jnp.maximum(h, 0.0)
    h = jnp.dot(h.astype(jnp.bfloat16), w3.astype(jnp.bfloat16),
                preferred_element_type=jnp.float32) + b3
    h = jnp.maximum(h, 0.0)
    return jnp.dot(h, w4, preferred_element_type=jnp.float32) + b4


def ref_forward_f32(x, params):
    h = x
    for i, (w, b) in enumerate(params):
        h = h @ w + b
        if i < 3:
            h = jnp.maximum(h, 0.0)
    return h


if __name__ == "__main__":
    key = jax.random.PRNGKey(0)
    key, kx, kx2 = jax.random.split(key, 3)
    params = init_params(key)

    # Small-batch check (single grid step, heavy batch padding path).
    B = 8
    x = jax.random.normal(kx, (B, 30), dtype=jnp.float32)
    out = jax.block_until_ready(net_forward(x, params))
    assert out.shape == (B, 1)
    assert jnp.allclose(out, ref_forward_bf16(x, params), atol=2e-3, rtol=2e-3)
    assert jnp.allclose(out, ref_forward_f32(x, params), atol=5e-2, rtol=5e-2)

    # Multi-tile check: non-multiple batch with a small tile exercises padding + grid > 1
    # (and the megacore >=2-step path).
    B2 = 1200
    x2 = jax.random.normal(kx2, (B2, 30), dtype=jnp.float32)
    out2 = jax.block_until_ready(net_forward(x2, params, tb=512))
    assert out2.shape == (B2, 1)
    assert jnp.allclose(out2, ref_forward_bf16(x2, params), atol=2e-3, rtol=2e-3)

    print("KERNEL_OK")
</pallas_src>

<mosaic_0001>
module attributes {stable_mosaic.version = 11 : i64} {
  func.func @_mlp_kernel(%arg0: i32, %arg1: memref<512x30xf32, #tpu.memory_space<vmem>>, %arg2: memref<23x30xbf16, #tpu.memory_space<vmem>>, %arg3: memref<23x1xf32, #tpu.memory_space<vmem>>, %arg4: memref<15x23xbf16, #tpu.memory_space<vmem>>, %arg5: memref<15x1xf32, #tpu.memory_space<vmem>>, %arg6: memref<8x15xbf16, #tpu.memory_space<vmem>>, %arg7: memref<8x1xf32, #tpu.memory_space<vmem>>, %arg8: memref<8x1xf32, #tpu.memory_space<vmem>>, %arg9: memref<1x1xf32, #tpu.memory_space<vmem>>, %arg10: memref<1x512xf32, #tpu.memory_space<vmem>>) attributes {dimension_semantics = [#tpu.dimension_semantics<parallel>], iteration_bounds = array<i64: 1>, scalar_prefetch = 0 : i64, scratch_operands = 0 : i64, tpu.core_type = #tpu.core_type<tc>, window_params = [{transform_indices = @transform_0, window_bounds = array<i64: 512, 30>}, {pipeline_mode = #tpu.pipeline_mode<synchronous>, transform_indices = @transform_1, window_bounds = array<i64: 23, 30>}, {pipeline_mode = #tpu.pipeline_mode<synchronous>, transform_indices = @transform_2, window_bounds = array<i64: 23, 1>}, {pipeline_mode = #tpu.pipeline_mode<synchronous>, transform_indices = @transform_3, window_bounds = array<i64: 15, 23>}, {pipeline_mode = #tpu.pipeline_mode<synchronous>, transform_indices = @transform_4, window_bounds = array<i64: 15, 1>}, {pipeline_mode = #tpu.pipeline_mode<synchronous>, transform_indices = @transform_5, window_bounds = array<i64: 8, 15>}, {pipeline_mode = #tpu.pipeline_mode<synchronous>, transform_indices = @transform_6, window_bounds = array<i64: 8, 1>}, {pipeline_mode = #tpu.pipeline_mode<synchronous>, transform_indices = @transform_7, window_bounds = array<i64: 8, 1>}, {pipeline_mode = #tpu.pipeline_mode<synchronous>, transform_indices = @transform_8, window_bounds = array<i64: 1, 1>}, {transform_indices = @transform_9, window_bounds = array<i64: 1, 512>}]} {
    %c0 = arith.constant 0 : index
    %c0_0 = arith.constant 0 : index
    %0 = vector.load %arg1[%c0, %c0_0] : memref<512x30xf32, #tpu.memory_space<vmem>>, vector<512x30xf32>
    %1 = arith.truncf %0 : vector<512x30xf32> to vector<512x30xbf16>
    %c0_1 = arith.constant 0 : index
    %c0_2 = arith.constant 0 : index
    %2 = vector.load %arg2[%c0_1, %c0_2] : memref<23x30xbf16, #tpu.memory_space<vmem>>, vector<23x30xbf16>
    %cst = arith.constant dense<0.000000e+00> : vector<23x512xf32>
    %3 = tpu.matmul %2, %1, %cst {dimension_numbers = #tpu.dot_dimension_numbers<[1], [1], [0], [0], [0, 0, 1, 0], [], []>} : vector<23x30xbf16>, vector<512x30xbf16>, vector<23x512xf32> -> vector<23x512xf32>
    %c0_3 = arith.constant 0 : index
    %c0_4 = arith.constant 0 : index
    %4 = vector.load %arg3[%c0_3, %c0_4] : memref<23x1xf32, #tpu.memory_space<vmem>>, vector<23x1xf32>
    %5 = vector.broadcast %4 : vector<23x1xf32> to vector<23x512xf32>
    %6 = arith.addf %3, %5 : vector<23x512xf32>
    %cst_5 = arith.constant 0.000000e+00 : f32
    %7 = vector.broadcast %cst_5 : f32 to vector<23x512xf32>
    %8 = arith.maximumf %6, %7 : vector<23x512xf32>
    %c0_6 = arith.constant 0 : index
    %c0_7 = arith.constant 0 : index
    %9 = vector.load %arg4[%c0_6, %c0_7] : memref<15x23xbf16, #tpu.memory_space<vmem>>, vector<15x23xbf16>
    %10 = arith.truncf %8 : vector<23x512xf32> to vector<23x512xbf16>
    %cst_8 = arith.constant dense<0.000000e+00> : vector<15x512xf32>
    %11 = tpu.matmul %9, %10, %cst_8 {dimension_numbers = #tpu.dot_dimension_numbers<[1], [0], [0], [1], [0, 0, 1, 1], [], []>} : vector<15x23xbf16>, vector<23x512xbf16>, vector<15x512xf32> -> vector<15x512xf32>
    %c0_9 = arith.constant 0 : index
    %c0_10 = arith.constant 0 : index
    %12 = vector.load %arg5[%c0_9, %c0_10] : memref<15x1xf32, #tpu.memory_space<vmem>>, vector<15x1xf32>
    %13 = vector.broadcast %12 : vector<15x1xf32> to vector<15x512xf32>
    %14 = arith.addf %11, %13 : vector<15x512xf32>
    %cst_11 = arith.constant 0.000000e+00 : f32
    %15 = vector.broadcast %cst_11 : f32 to vector<15x512xf32>
    %16 = arith.maximumf %14, %15 : vector<15x512xf32>
    %c0_12 = arith.constant 0 : index
    %c0_13 = arith.constant 0 : index
    %17 = vector.load %arg6[%c0_12, %c0_13] : memref<8x15xbf16, #tpu.memory_space<vmem>>, vector<8x15xbf16>
    %18 = arith.truncf %16 : vector<15x512xf32> to vector<15x512xbf16>
    %cst_14 = arith.constant dense<0.000000e+00> : vector<8x512xf32>
    %19 = tpu.matmul %17, %18, %cst_14 {dimension_numbers = #tpu.dot_dimension_numbers<[1], [0], [0], [1], [0, 0, 1, 1], [], []>} : vector<8x15xbf16>, vector<15x512xbf16>, vector<8x512xf32> -> vector<8x512xf32>
    %c0_15 = arith.constant 0 : index
    %c0_16 = arith.constant 0 : index
    %20 = vector.load %arg7[%c0_15, %c0_16] : memref<8x1xf32, #tpu.memory_space<vmem>>, vector<8x1xf32>
    %21 = vector.broadcast %20 : vector<8x1xf32> to vector<8x512xf32>
    %22 = arith.addf %19, %21 : vector<8x512xf32>
    %cst_17 = arith.constant 0.000000e+00 : f32
    %23 = vector.broadcast %cst_17 : f32 to vector<8x512xf32>
    %24 = arith.maximumf %22, %23 : vector<8x512xf32>
    %c0_18 = arith.constant 0 : index
    %c0_19 = arith.constant 0 : index
    %25 = vector.load %arg8[%c0_18, %c0_19] : memref<8x1xf32, #tpu.memory_space<vmem>>, vector<8x1xf32>
    %26 = vector.broadcast %25 : vector<8x1xf32> to vector<8x512xf32>
    %27 = arith.mulf %26, %24 : vector<8x512xf32>
    %cst_20 = arith.constant dense<0.000000e+00> : vector<512xf32>
    %28 = vector.multi_reduction <add>, %27, %cst_20 [0] : vector<8x512xf32> to vector<512xf32>
    %29 = vector.shape_cast %28 : vector<512xf32> to vector<1x512xf32>
    %c0_21 = arith.constant 0 : index
    %c0_22 = arith.constant 0 : index
    %30 = vector.load %arg9[%c0_21, %c0_22] : memref<1x1xf32, #tpu.memory_space<vmem>>, vector<1x1xf32>
    %31 = vector.broadcast %30 : vector<1x1xf32> to vector<1x512xf32>
    %32 = arith.addf %29, %31 : vector<1x512xf32>
    %c0_23 = arith.constant 0 : index
    %c0_24 = arith.constant 0 : index
    %33 = vector.load %arg10[%c0_23, %c0_24] : memref<1x512xf32, #tpu.memory_space<vmem>>, vector<1x512xf32>
    tpu.vector_store %arg10[%c0_23, %c0_24], %32 {strides = array<i32>} : memref<1x512xf32, #tpu.memory_space<vmem>>, vector<1x512xf32>,
    return
  }
  func.func @transform_0(%arg0: i32) -> (i32, i32) {
    %c0_i32 = arith.constant 0 : i32
    %c0_i32_0 = arith.constant 0 : i32
    return %arg0, %c0_i32 : i32, i32
  }
  func.func @transform_1(%arg0: i32) -> (i32, i32) {
    %c0_i32 = arith.constant 0 : i32
    %c0_i32_0 = arith.constant 0 : i32
    %c0_i32_1 = arith.constant 0 : i32
    return %c0_i32, %c0_i32_0 : i32, i32
  }
  func.func @transform_2(%arg0: i32) -> (i32, i32) {
    %c0_i32 = arith.constant 0 : i32
    %c0_i32_0 = arith.constant 0 : i32
    %c0_i32_1 = arith.constant 0 : i32
    return %c0_i32, %c0_i32_0 : i32, i32
  }
  func.func @transform_3(%arg0: i32) -> (i32, i32) {
    %c0_i32 = arith.constant 0 : i32
    %c0_i32_0 = arith.constant 0 : i32
    %c0_i32_1 = arith.constant 0 : i32
    return %c0_i32, %c0_i32_0 : i32, i32
  }
  func.func @transform_4(%arg0: i32) -> (i32, i32) {
    %c0_i32 = arith.constant 0 : i32
    %c0_i32_0 = arith.constant 0 : i32
    %c0_i32_1 = arith.constant 0 : i32
    return %c0_i32, %c0_i32_0 : i32, i32
  }
  func.func @transform_5(%arg0: i32) -> (i32, i32) {
    %c0_i32 = arith.constant 0 : i32
    %c0_i32_0 = arith.constant 0 : i32
    %c0_i32_1 = arith.constant 0 : i32
    return %c0_i32, %c0_i32_0 : i32, i32
  }
  func.func @transform_6(%arg0: i32) -> (i32, i32) {
    %c0_i32 = arith.constant 0 : i32
    %c0_i32_0 = arith.constant 0 : i32
    %c0_i32_1 = arith.constant 0 : i32
    return %c0_i32, %c0_i32_0 : i32, i32
  }
  func.func @transform_7(%arg0: i32) -> (i32, i32) {
    %c0_i32 = arith.constant 0 : i32
    %c0_i32_0 = arith.constant 0 : i32
    %c0_i32_1 = arith.constant 0 : i32
    return %c0_i32, %c0_i32_0 : i32, i32
  }
  func.func @transform_8(%arg0: i32) -> (i32, i32) {
    %c0_i32 = arith.constant 0 : i32
    %c0_i32_0 = arith.constant 0 : i32
    %c0_i32_1 = arith.constant 0 : i32
    return %c0_i32, %c0_i32_0 : i32, i32
  }
  func.func @transform_9(%arg0: i32) -> (i32, i32) {
    %c0_i32 = arith.constant 0 : i32
    %c0_i32_0 = arith.constant 0 : i32
    return %c0_i32, %arg0 : i32, i32
  }
}

</mosaic_0001>

<llo_original>
// kernel: tpu_custom_call.1
$region0: #{tpu_custom_call.1}
  #allocation0 [shape = 'u32[]', space=smem, size = 0x4, offset = 0x4, fixed_abs, tag = 'smem constant byte address 0x4 - core index']
  #allocation1 [shape = 'u32[72,128]{1,0:T(1,128)}', space=vmem, size = 0x9000, scoped, tag = 'internal scratch']
  #allocation2 [shape = 'f32[1,1]{1,0:T(1,128)S(1)}', space=vmem, size = 0x200, scoped, tag = 'scoped memory for tpu_custom_call.1']
  %s0 = inlined_call_operand.vmem [shape: f32[512,30], index: 0, kind: input, shape index: {}]
  %s1 = inlined_call_operand.vmem [shape: bf16[23,30], index: 1, kind: input, shape index: {}]
  %s2 = inlined_call_operand.vmem [shape: f32[23,1], index: 2, kind: input, shape index: {}]
  %s3 = inlined_call_operand.vmem [shape: bf16[15,23], index: 3, kind: input, shape index: {}]
  %s4 = inlined_call_operand.vmem [shape: f32[15,1], index: 4, kind: input, shape index: {}]
  %s5 = inlined_call_operand.vmem [shape: bf16[8,15], index: 5, kind: input, shape index: {}]
  %s6 = inlined_call_operand.vmem [shape: f32[8,1], index: 6, kind: input, shape index: {}]
  %s7 = inlined_call_operand.vmem [shape: f32[8,1], index: 7, kind: input, shape index: {}]
  %s8 = inlined_call_operand.<no memory space> [shape: f32[1,1], index: 8, kind: input, shape index: {}]
  %s9 = inlined_call_operand.hbm [shape: f32[1,512], index: 9, kind: output, shape index: {}]
  %s10 = sld [smem:[#allocation0]]
  $region46: #{tpu_custom_call.1} parent=0
    _
  %s12 = ssub.s32 1, %s10
  %s13 = scalar_select 0, %s12, %s10
  %v14 = vstv %s8
  %15 = vst [vmem:[#allocation2] sm:$0x1] %v14
  $region1: #{tpu_custom_call.1} parent=0
    #allocation3 [shape = 'u8[2048]{0}', space=vmem, size = 0x800, scoped, tag = 'output window, operand 0, single buffered']
    #allocation4 [shape = 's32[1]{0}', space=sflag, size = 0x4, scoped, tag = 'scoped memory for tpu_custom_call.1']
    %16 = vsyncpa [#allocation4], 0
    // Predicated region
    $region2: #{tpu_custom_call.1} parent=1 // pred_check
      _
    $region3: #{tpu_custom_call.1} parent=1 // pred_check_branch
      %18 = sbr.rel (0) target = $region5
    $region4: #{tpu_custom_call.1} parent=1 // pred_region
      _
    $region5: #{tpu_custom_call.1} parent=1 // pred_fallthru
      _
    // Predicated region
    $region6: #{tpu_custom_call.1} parent=1 // pred_check
      _
    $region7: #{tpu_custom_call.1} parent=1 // pred_check_branch
      %20 = sbr.rel (0) target = $region9
    $region8: #{tpu_custom_call.1} parent=1 // pred_region
      _
    $region9: #{tpu_custom_call.1} parent=1 // pred_fallthru
      _
    // Predicated region
    $region10: #{tpu_custom_call.1} parent=1 // pred_check
      _
    $region11: #{tpu_custom_call.1} parent=1 // pred_check_branch
      %22 = sbr.rel (0) target = $region13
    $region12: #{tpu_custom_call.1} parent=1 // pred_region
      _
    $region13: #{tpu_custom_call.1} parent=1 // pred_fallthru
      _
    // Predicated region
    $region14: #{tpu_custom_call.1} parent=1 // pred_check
      _
    $region15: #{tpu_custom_call.1} parent=1 // pred_check_branch
      %24 = sbr.rel (0) target = $region17
    $region16: #{tpu_custom_call.1} parent=1 // pred_region
      _
    $region17: #{tpu_custom_call.1} parent=1 // pred_fallthru
      _
    // Predicated region
    $region18: #{tpu_custom_call.1} parent=1 // pred_check
      _
    $region19: #{tpu_custom_call.1} parent=1 // pred_check_branch
      %26 = sbr.rel (0) target = $region21
    $region20: #{tpu_custom_call.1} parent=1 // pred_region
      _
    $region21: #{tpu_custom_call.1} parent=1 // pred_fallthru
      _
    // Predicated region
    $region22: #{tpu_custom_call.1} parent=1 // pred_check
      _
    $region23: #{tpu_custom_call.1} parent=1 // pred_check_branch
      %28 = sbr.rel (0) target = $region25
    $region24: #{tpu_custom_call.1} parent=1 // pred_region
      _
    $region25: #{tpu_custom_call.1} parent=1 // pred_fallthru
      _
    // Predicated region
    $region26: #{tpu_custom_call.1} parent=1 // pred_check
      _
    $region27: #{tpu_custom_call.1} parent=1 // pred_check_branch
      %30 = sbr.rel (0) target = $region29
    $region28: #{tpu_custom_call.1} parent=1 // pred_region
      _
    $region29: #{tpu_custom_call.1} parent=1 // pred_fallthru
      _
    // Predicated region
    $region30: #{tpu_custom_call.1} parent=1 // pred_check
      _
    $region31: #{tpu_custom_call.1} parent=1 // pred_check_branch
      %32 = sbr.rel (0) target = $region33
    $region32: #{tpu_custom_call.1} parent=1 // pred_region
      _
    $region33: #{tpu_custom_call.1} parent=1 // pred_fallthru
      _
    // Predicated region
    $region34: #{tpu_custom_call.1} parent=1 // pred_check
      _
    $region35: #{tpu_custom_call.1} parent=1 // pred_check_branch
      %34 = sbr.rel (0) target = $region37
    $region36: #{tpu_custom_call.1} parent=1 // pred_region
      _
    $region37: #{tpu_custom_call.1} parent=1 // pred_fallthru
      _
    %v36 = vld [vmem:[%s0] sm:$0xff]
    %v37 = vld [vmem:[%s0 + $0x8] sm:$0xff]
    %v38 = vld [vmem:[%s0 + $0x10] sm:$0xff]
    %v39 = vld [vmem:[%s0 + $0x18] sm:$0xff]
    %v40 = vld [vmem:[%s0 + $0x20] sm:$0xff]
    %v41 = vld [vmem:[%s0 + $0x28] sm:$0xff]
    %v42 = vld [vmem:[%s0 + $0x30] sm:$0xff]
    %v43 = vld [vmem:[%s0 + $0x38] sm:$0xff]
    %v44 = vld [vmem:[%s0 + $0x40] sm:$0xff]
    %v45 = vld [vmem:[%s0 + $0x48] sm:$0xff]
    %v46 = vld [vmem:[%s0 + $0x50] sm:$0xff]
    %v47 = vld [vmem:[%s0 + $0x58] sm:$0xff]
    %v48 = vld [vmem:[%s0 + $0x60] sm:$0xff]
    %v49 = vld [vmem:[%s0 + $0x68] sm:$0xff]
    %v50 = vld [vmem:[%s0 + $0x70] sm:$0xff]
    %v51 = vld [vmem:[%s0 + $0x78] sm:$0xff]
    %v52 = vld [vmem:[%s0 + $0x80] sm:$0xff]
    %v53 = vld [vmem:[%s0 + $0x88] sm:$0xff]
    %v54 = vld [vmem:[%s0 + $0x90] sm:$0xff]
    %v55 = vld [vmem:[%s0 + $0x98] sm:$0xff]
    %v56 = vld [vmem:[%s0 + $0xa0] sm:$0xff]
    %v57 = vld [vmem:[%s0 + $0xa8] sm:$0xff]
    %v58 = vld [vmem:[%s0 + $0xb0] sm:$0xff]
    %v59 = vld [vmem:[%s0 + $0xb8] sm:$0xff]
    %v60 = vld [vmem:[%s0 + $0xc0] sm:$0xff]
    %v61 = vld [vmem:[%s0 + $0xc8] sm:$0xff]
    %v62 = vld [vmem:[%s0 + $0xd0] sm:$0xff]
    %v63 = vld [vmem:[%s0 + $0xd8] sm:$0xff]
    %v64 = vld [vmem:[%s0 + $0xe0] sm:$0xff]
    %v65 = vld [vmem:[%s0 + $0xe8] sm:$0xff]
    %v66 = vld [vmem:[%s0 + $0xf0] sm:$0xff]
    %v67 = vld [vmem:[%s0 + $0xf8] sm:$0xff]
    %v68 = vld [vmem:[%s0 + $0x100] sm:$0xff]
    %v69 = vld [vmem:[%s0 + $0x108] sm:$0xff]
    %v70 = vld [vmem:[%s0 + $0x110] sm:$0xff]
    %v71 = vld [vmem:[%s0 + $0x118] sm:$0xff]
    %v72 = vld [vmem:[%s0 + $0x120] sm:$0xff]
    %v73 = vld [vmem:[%s0 + $0x128] sm:$0xff]
    %v74 = vld [vmem:[%s0 + $0x130] sm:$0xff]
    %v75 = vld [vmem:[%s0 + $0x138] sm:$0xff]
    %v76 = vld [vmem:[%s0 + $0x140] sm:$0xff]
    %v77 = vld [vmem:[%s0 + $0x148] sm:$0xff]
    %v78 = vld [vmem:[%s0 + $0x150] sm:$0xff]
    %v79 = vld [vmem:[%s0 + $0x158] sm:$0xff]
    %v80 = vld [vmem:[%s0 + $0x160] sm:$0xff]
    %v81 = vld [vmem:[%s0 + $0x168] sm:$0xff]
    %v82 = vld [vmem:[%s0 + $0x170] sm:$0xff]
    %v83 = vld [vmem:[%s0 + $0x178] sm:$0xff]
    %v84 = vld [vmem:[%s0 + $0x180] sm:$0xff]
    %v85 = vld [vmem:[%s0 + $0x188] sm:$0xff]
    %v86 = vld [vmem:[%s0 + $0x190] sm:$0xff]
    %v87 = vld [vmem:[%s0 + $0x198] sm:$0xff]
    %v88 = vld [vmem:[%s0 + $0x1a0] sm:$0xff]
    %v89 = vld [vmem:[%s0 + $0x1a8] sm:$0xff]
    %v90 = vld [vmem:[%s0 + $0x1b0] sm:$0xff]
    %v91 = vld [vmem:[%s0 + $0x1b8] sm:$0xff]
    %v92 = vld [vmem:[%s0 + $0x1c0] sm:$0xff]
    %v93 = vld [vmem:[%s0 + $0x1c8] sm:$0xff]
    %v94 = vld [vmem:[%s0 + $0x1d0] sm:$0xff]
    %v95 = vld [vmem:[%s0 + $0x1d8] sm:$0xff]
    %v96 = vld [vmem:[%s0 + $0x1e0] sm:$0xff]
    %v97 = vld [vmem:[%s0 + $0x1e8] sm:$0xff]
    %v98 = vld [vmem:[%s0 + $0x1f0] sm:$0xff]
    %v99 = vld [vmem:[%s0 + $0x1f8] sm:$0xff]
    %v100 = vpack.c.bf16 %v37, %v36
    %v101 = vpack.c.bf16 %v39, %v38
    %v102 = vpack.c.bf16 %v41, %v40
    %v103 = vpack.c.bf16 %v43, %v42
    %v104 = vpack.c.bf16 %v45, %v44
    %v105 = vpack.c.bf16 %v47, %v46
    %v106 = vpack.c.bf16 %v49, %v48
    %v107 = vpack.c.bf16 %v51, %v50
    %v108 = vpack.c.bf16 %v53, %v52
    %v109 = vpack.c.bf16 %v55, %v54
    %v110 = vpack.c.bf16 %v57, %v56
    %v111 = vpack.c.bf16 %v59, %v58
    %v112 = vpack.c.bf16 %v61, %v60
    %v113 = vpack.c.bf16 %v63, %v62
    %v114 = vpack.c.bf16 %v65, %v64
    %v115 = vpack.c.bf16 %v67, %v66
    %v116 = vpack.c.bf16 %v69, %v68
    %v117 = vpack.c.bf16 %v71, %v70
    %v118 = vpack.c.bf16 %v73, %v72
    %v119 = vpack.c.bf16 %v75, %v74
    %v120 = vpack.c.bf16 %v77, %v76
    %v121 = vpack.c.bf16 %v79, %v78
    %v122 = vpack.c.bf16 %v81, %v80
    %v123 = vpack.c.bf16 %v83, %v82
    %v124 = vpack.c.bf16 %v85, %v84
    %v125 = vpack.c.bf16 %v87, %v86
    %v126 = vpack.c.bf16 %v89, %v88
    %v127 = vpack.c.bf16 %v91, %v90
    %v128 = vpack.c.bf16 %v93, %v92
    %v129 = vpack.c.bf16 %v95, %v94
    %v130 = vpack.c.bf16 %v97, %v96
    %v131 = vpack.c.bf16 %v99, %v98
    %v132 = vld [vmem:[%s1] sm:$0xf]
    %v133 = vld [vmem:[%s1 + $0x4] sm:$0xf]
    %v134 = vld [vmem:[%s1 + $0x8] sm:$0xf]
    %v135 = vld [vmem:[%s2] sm:$0xff]
    %v136 = vld [vmem:[%s2 + $0x8] sm:$0xff]
    %v137 = vld [vmem:[%s2 + $0x10] sm:$0x7f]
    %139 = vset.pattern.permute.xlu0 0
    %140 = vperm.xlu0 %139, %v135
    %v141 = vpop.permute.xlu0 %140
    %144 = vset.pattern.permute.xlu0 0
    %145 = vperm.xlu0 %144, %v136
    %v146 = vpop.permute.xlu0 %145
    %149 = vset.pattern.permute.xlu0 0
    %150 = vperm.xlu0 %149, %v137
    %v151 = vpop.permute.xlu0 %150
    %v156 = vunpack.c.l.b16 %v132
    %v157 = vunpack.c.l.b16 %v133
    %v158 = vunpack.c.l.b16 %v134
    %v159 = vpack.c.b16 %v157, %v156
    %v160 = vpack.c.b16 %v158, %v158
    %vm161 = vcmask 244736
    %v163 = vsel %vm161, %v159, 0
    %v166 = vsel %vm161, %v160, 0
    %v169 = vsel %vm161, %v100, 0
    %v172 = vsel %vm161, %v101, 0
    %v175 = vsel %vm161, %v102, 0
    %v178 = vsel %vm161, %v103, 0
    %v181 = vsel %vm161, %v104, 0
    %v184 = vsel %vm161, %v105, 0
    %v187 = vsel %vm161, %v106, 0
    %v190 = vsel %vm161, %v107, 0
    %v193 = vsel %vm161, %v108, 0
    %v196 = vsel %vm161, %v109, 0
    %v199 = vsel %vm161, %v110, 0
    %v202 = vsel %vm161, %v111, 0
    %v205 = vsel %vm161, %v112, 0
    %v208 = vsel %vm161, %v113, 0
    %v211 = vsel %vm161, %v114, 0
    %v214 = vsel %vm161, %v115, 0
    %v217 = vsel %vm161, %v116, 0
    %v220 = vsel %vm161, %v117, 0
    %v223 = vsel %vm161, %v118, 0
    %v226 = vsel %vm161, %v119, 0
    %v229 = vsel %vm161, %v120, 0
    %v232 = vsel %vm161, %v121, 0
    %v235 = vsel %vm161, %v122, 0
    %v238 = vsel %vm161, %v123, 0
    %v241 = vsel %vm161, %v124, 0
    %v244 = vsel %vm161, %v125, 0
    %v247 = vsel %vm161, %v126, 0
    %v250 = vsel %vm161, %v127, 0
    %v253 = vsel %vm161, %v128, 0
    %v256 = vsel %vm161, %v129, 0
    %v259 = vsel %vm161, %v130, 0
    %v262 = vsel %vm161, %v131, 0
    %264 = vmatpush.bf16.xpose.msra.mxu0 %v190
    %265 = vmatpush.bf16.xpose.msra.mxu0 %v187
    %266 = vmatpush.bf16.xpose.msra.mxu0 %v184
    %267 = vmatpush.bf16.xpose.msra.mxu0 %v181
    %268 = vmatpush.bf16.xpose.msra.mxu0 %v178
    %269 = vmatpush.bf16.xpose.msra.mxu0 %v175
    %270 = vmatpush.bf16.xpose.msra.mxu0 %v172
    %271 = vmatpush.bf16.xpose.msra.mxu0 %v169
    %272 = vmatmul.bf16.gmra.mxu0 %v163
    %v273 = vpop.f32.mrf.mxu0
    %v274 = vadd.f32 %v141, %v273
    %v275 = vpop.f32.mrf.mxu0
    %v276 = vadd.f32 %v146, %v275
    %277 = vmatmul.bf16.gmra.mxu0 %v166
    %v278 = vpop.f32.mrf.mxu0
    %v279 = vadd.f32 %v151, %v278
    %v280 = vpop.f32.mrf.mxu0
    %281 = vdwg.mxu0
    %282 = vmatpush.bf16.xpose.msra.mxu0 %v214
    %283 = vmatpush.bf16.xpose.msra.mxu0 %v211
    %284 = vmatpush.bf16.xpose.msra.mxu0 %v208
    %285 = vmatpush.bf16.xpose.msra.mxu0 %v205
    %286 = vmatpush.bf16.xpose.msra.mxu0 %v202
    %287 = vmatpush.bf16.xpose.msra.mxu0 %v199
    %288 = vmatpush.bf16.xpose.msra.mxu0 %v196
    %289 = vmatpush.bf16.xpose.msra.mxu0 %v193
    %290 = vmatmul.bf16.gmra.mxu0 %v163
    %v291 = vpop.f32.mrf.mxu0
    %v292 = vadd.f32 %v141, %v291
    %v293 = vpop.f32.mrf.mxu0
    %v294 = vadd.f32 %v146, %v293
    %295 = vmatmul.bf16.gmra.mxu0 %v166
    %v296 = vpop.f32.mrf.mxu0
    %v297 = vadd.f32 %v151, %v296
    %v298 = vpop.f32.mrf.mxu0
    %299 = vdwg.mxu0
    %300 = vmatpush.bf16.xpose.msra.mxu0 %v238
    %301 = vmatpush.bf16.xpose.msra.mxu0 %v235
    %302 = vmatpush.bf16.xpose.msra.mxu0 %v232
    %303 = vmatpush.bf16.xpose.msra.mxu0 %v229
    %304 = vmatpush.bf16.xpose.msra.mxu0 %v226
    %305 = vmatpush.bf16.xpose.msra.mxu0 %v223
    %306 = vmatpush.bf16.xpose.msra.mxu0 %v220
    %307 = vmatpush.bf16.xpose.msra.mxu0 %v217
    %308 = vmatmul.bf16.gmra.mxu0 %v163
    %v309 = vpop.f32.mrf.mxu0
    %v310 = vadd.f32 %v141, %v309
    %v311 = vpop.f32.mrf.mxu0
    %v312 = vadd.f32 %v146, %v311
    %313 = vmatmul.bf16.gmra.mxu0 %v166
    %v314 = vpop.f32.mrf.mxu0
    %v315 = vadd.f32 %v151, %v314
    %v316 = vpop.f32.mrf.mxu0
    %317 = vdwg.mxu0
    %318 = vmatpush.bf16.xpose.msra.mxu0 %v262
    %319 = vmatpush.bf16.xpose.msra.mxu0 %v259
    %320 = vmatpush.bf16.xpose.msra.mxu0 %v256
    %321 = vmatpush.bf16.xpose.msra.mxu0 %v253
    %322 = vmatpush.bf16.xpose.msra.mxu0 %v250
    %323 = vmatpush.bf16.xpose.msra.mxu0 %v247
    %324 = vmatpush.bf16.xpose.msra.mxu0 %v244
    %325 = vmatpush.bf16.xpose.msra.mxu0 %v241
    %326 = vmatmul.bf16.gmra.mxu0 %v163
    %v327 = vpop.f32.mrf.mxu0
    %v328 = vadd.f32 %v141, %v327
    %v329 = vpop.f32.mrf.mxu0
    %v330 = vadd.f32 %v146, %v329
    %331 = vmatmul.bf16.gmra.mxu0 %v166
    %v332 = vpop.f32.mrf.mxu0
    %v333 = vadd.f32 %v151, %v332
    %v334 = vpop.f32.mrf.mxu0
    %335 = vdwg.mxu0
    %v336 = vmax.f32 %v274, 0.0
    %v337 = vmax.f32 %v292, 0.0
    %v338 = vmax.f32 %v310, 0.0
    %v339 = vmax.f32 %v328, 0.0
    %v340 = vmax.f32 %v276, 0.0
    %v341 = vmax.f32 %v294, 0.0
    %v342 = vmax.f32 %v312, 0.0
    %v343 = vmax.f32 %v330, 0.0
    %v344 = vmax.f32 %v279, 0.0
    %v345 = vmax.f32 %v297, 0.0
    %v346 = vmax.f32 %v315, 0.0
    %v347 = vmax.f32 %v333, 0.0
    %v348 = vld [vmem:[%s3] sm:$0xf]
    %v349 = vld [vmem:[%s3 + $0x4] sm:$0xf]
    %v350 = vpack.c.bf16 %v340, %v336
    %v351 = vpack.c.bf16 %v341, %v337
    %v352 = vpack.c.bf16 %v342, %v338
    %v353 = vpack.c.bf16 %v343, %v339
    %v354 = vpack.c.bf16 %v344, %v344
    %v355 = vpack.c.bf16 %v345, %v345
    %v356 = vpack.c.bf16 %v346, %v346
    %v357 = vpack.c.bf16 %v347, %v347
    %v358 = vld [vmem:[%s4] sm:$0xff]
    %v359 = vld [vmem:[%s4 + $0x8] sm:$0x7f]
    %361 = vset.pattern.permute.xlu0 0
    %362 = vperm.xlu0 %361, %v358
    %v363 = vpop.permute.xlu0 %362
    %366 = vset.pattern.permute.xlu0 0
    %367 = vperm.xlu0 %366, %v359
    %v368 = vpop.permute.xlu0 %367
    %v372 = vunpack.c.l.b16 %v348
    %v373 = vunpack.c.l.b16 %v349
    %v374 = vpack.c.b16 %v373, %v372
    %vm375 = vcmask 187392
    %v377 = vsel %vm375, %v374, 0
    %vm379 = vcmask 1042432
    %vm380 = vcmask 1043456
    %v381 = vsel %vm379, 4294967295, 65535
    %v382 = vsel %vm380, %v381, 0
    %v384 = vand.u32 %v354, %v382
    %v387 = vand.u32 %v355, %v382
    %v390 = vand.u32 %v356, %v382
    %v393 = vand.u32 %v357, %v382
    %395 = vmatpush.bf16.msra.mxu0 0
    %396 = vmatpush.bf16.msra.mxu0 0
    %397 = vmatpush.bf16.msra.mxu0 0
    %398 = vmatpush.bf16.msra.mxu0 0
    %399 = vmatpush.bf16.msra.mxu0 0
    %400 = vmatpush.bf16.msra.mxu0 0
    %401 = vmatpush.bf16.msra.mxu0 %v384
    %402 = vmatpush.bf16.msra.mxu0 %v350
    %403 = vmatmul.bf16.gmra.mxu0 %v377
    %v404 = vpop.f32.mrf.mxu0
    %v405 = vadd.f32 %v363, %v404
    %v406 = vpop.f32.mrf.mxu0
    %v407 = vadd.f32 %v368, %v406
    %408 = vdwg.mxu0
    %409 = vmatpush.bf16.msra.mxu0 0
    %410 = vmatpush.bf16.msra.mxu0 0
    %411 = vmatpush.bf16.msra.mxu0 0
    %412 = vmatpush.bf16.msra.mxu0 0
    %413 = vmatpush.bf16.msra.mxu0 0
    %414 = vmatpush.bf16.msra.mxu0 0
    %415 = vmatpush.bf16.msra.mxu0 %v387
    %416 = vmatpush.bf16.msra.mxu0 %v351
    %417 = vmatmul.bf16.gmra.mxu0 %v377
    %v418 = vpop.f32.mrf.mxu0
    %v419 = vadd.f32 %v363, %v418
    %v420 = vpop.f32.mrf.mxu0
    %v421 = vadd.f32 %v368, %v420
    %422 = vdwg.mxu0
    %423 = vmatpush.bf16.msra.mxu0 0
    %424 = vmatpush.bf16.msra.mxu0 0
    %425 = vmatpush.bf16.msra.mxu0 0
    %426 = vmatpush.bf16.msra.mxu0 0
    %427 = vmatpush.bf16.msra.mxu0 0
    %428 = vmatpush.bf16.msra.mxu0 0
    %429 = vmatpush.bf16.msra.mxu0 %v390
    %430 = vmatpush.bf16.msra.mxu0 %v352
    %431 = vmatmul.bf16.gmra.mxu0 %v377
    %v432 = vpop.f32.mrf.mxu0
    %v433 = vadd.f32 %v363, %v432
    %v434 = vpop.f32.mrf.mxu0
    %v435 = vadd.f32 %v368, %v434
    %436 = vdwg.mxu0
    %437 = vmatpush.bf16.msra.mxu0 0
    %438 = vmatpush.bf16.msra.mxu0 0
    %439 = vmatpush.bf16.msra.mxu0 0
    %440 = vmatpush.bf16.msra.mxu0 0
    %441 = vmatpush.bf16.msra.mxu0 0
    %442 = vmatpush.bf16.msra.mxu0 0
    %443 = vmatpush.bf16.msra.mxu0 %v393
    %444 = vmatpush.bf16.msra.mxu0 %v353
    %445 = vmatmul.bf16.gmra.mxu0 %v377
    %v446 = vpop.f32.mrf.mxu0
    %v447 = vadd.f32 %v363, %v446
    %v448 = vpop.f32.mrf.mxu0
    %v449 = vadd.f32 %v368, %v448
    %450 = vdwg.mxu0
    %v451 = vmax.f32 %v405, 0.0
    %v452 = vmax.f32 %v419, 0.0
    %v453 = vmax.f32 %v433, 0.0
    %v454 = vmax.f32 %v447, 0.0
    %v455 = vmax.f32 %v407, 0.0
    %v456 = vmax.f32 %v421, 0.0
    %v457 = vmax.f32 %v435, 0.0
    %v458 = vmax.f32 %v449, 0.0
    %v459 = vld [vmem:[%s5] sm:$0xf]
    %v460 = vpack.c.bf16 %v455, %v451
    %v461 = vpack.c.bf16 %v456, %v452
    %v462 = vpack.c.bf16 %v457, %v453
    %v463 = vpack.c.bf16 %v458, %v454
    %v464 = vld [vmem:[%s6] sm:$0xff]
    %466 = vset.pattern.permute.xlu0 0
    %467 = vperm.xlu0 %466, %v464
    %v468 = vpop.permute.xlu0 %467
    %vm470 = vcmask 121856
    %v472 = vsel %vm470, %v459, 0
    %vm474 = vcmask 1046528
    %vm475 = vcmask 1047552
    %v476 = vsel %vm474, 4294967295, 65535
    %v477 = vsel %vm475, %v476, 0
    %v479 = vand.u32 %v460, %v477
    %v482 = vand.u32 %v461, %v477
    %v485 = vand.u32 %v462, %v477
    %v488 = vand.u32 %v463, %v477
    %490 = vmatpush.bf16.msra.mxu0 0
    %491 = vmatpush.bf16.msra.mxu0 0
    %492 = vmatpush.bf16.msra.mxu0 0
    %493 = vmatpush.bf16.msra.mxu0 0
    %494 = vmatpush.bf16.msra.mxu0 0
    %495 = vmatpush.bf16.msra.mxu0 0
    %496 = vmatpush.bf16.msra.mxu0 0
    %497 = vmatpush.bf16.msra.mxu0 %v479
    %498 = vmatmul.bf16.gmra.mxu0 %v472
    %v499 = vpop.f32.mrf.mxu0
    %v500 = vadd.f32 %v468, %v499
    %v501 = vpop.f32.mrf.mxu0
    %502 = vdwg.mxu0
    %503 = vmatpush.bf16.msra.mxu0 0
    %504 = vmatpush.bf16.msra.mxu0 0
    %505 = vmatpush.bf16.msra.mxu0 0
    %506 = vmatpush.bf16.msra.mxu0 0
    %507 = vmatpush.bf16.msra.mxu0 0
    %508 = vmatpush.bf16.msra.mxu0 0
    %509 = vmatpush.bf16.msra.mxu0 0
    %510 = vmatpush.bf16.msra.mxu0 %v482
    %511 = vmatmul.bf16.gmra.mxu0 %v472
    %v512 = vpop.f32.mrf.mxu0
    %v513 = vadd.f32 %v468, %v512
    %v514 = vpop.f32.mrf.mxu0
    %515 = vdwg.mxu0
    %516 = vmatpush.bf16.msra.mxu0 0
    %517 = vmatpush.bf16.msra.mxu0 0
    %518 = vmatpush.bf16.msra.mxu0 0
    %519 = vmatpush.bf16.msra.mxu0 0
    %520 = vmatpush.bf16.msra.mxu0 0
    %521 = vmatpush.bf16.msra.mxu0 0
    %522 = vmatpush.bf16.msra.mxu0 0
    %523 = vmatpush.bf16.msra.mxu0 %v485
    %524 = vmatmul.bf16.gmra.mxu0 %v472
    %v525 = vpop.f32.mrf.mxu0
    %v526 = vadd.f32 %v468, %v525
    %v527 = vpop.f32.mrf.mxu0
    %528 = vdwg.mxu0
    %529 = vmatpush.bf16.msra.mxu0 0
    %530 = vmatpush.bf16.msra.mxu0 0
    %531 = vmatpush.bf16.msra.mxu0 0
    %532 = vmatpush.bf16.msra.mxu0 0
    %533 = vmatpush.bf16.msra.mxu0 0
    %534 = vmatpush.bf16.msra.mxu0 0
    %535 = vmatpush.bf16.msra.mxu0 0
    %536 = vmatpush.bf16.msra.mxu0 %v488
    %537 = vmatmul.bf16.gmra.mxu0 %v472
    %v538 = vpop.f32.mrf.mxu0
    %v539 = vadd.f32 %v468, %v538
    %v540 = vpop.f32.mrf.mxu0
    %541 = vdwg.mxu0
    %v542 = vmax.f32 %v500, 0.0
    %v543 = vmax.f32 %v513, 0.0
    %v544 = vmax.f32 %v526, 0.0
    %v545 = vmax.f32 %v539, 0.0
    %v546 = vld [vmem:[%s7] sm:$0xff]
    %548 = vset.pattern.permute.xlu0 0
    %549 = vperm.xlu0 %548, %v546
    %v550 = vpop.permute.xlu0 %549
    %v552 = vmul.f32 %v550, %v542
    %v553 = vmul.f32 %v550, %v543
    %v554 = vmul.f32 %v550, %v544
    %v555 = vmul.f32 %v550, %v545
    %v556 = vrot.slane %v552, 4
    %v557 = vadd.f32 %v552, %v556
    %v558 = vrot.slane %v557, 2
    %v559 = vadd.f32 %v557, %v558
    %v560 = vrot.slane %v559, 1
    %v561 = vadd.f32 %v559, %v560
    %v562 = vrot.slane %v553, 4
    %v563 = vadd.f32 %v553, %v562
    %v564 = vrot.slane %v563, 2
    %v565 = vadd.f32 %v563, %v564
    %v566 = vrot.slane %v565, 1
    %v567 = vadd.f32 %v565, %v566
    %v568 = vrot.slane %v554, 4
    %v569 = vadd.f32 %v554, %v568
    %v570 = vrot.slane %v569, 2
    %v571 = vadd.f32 %v569, %v570
    %v572 = vrot.slane %v571, 1
    %v573 = vadd.f32 %v571, %v572
    %v574 = vrot.slane %v555, 4
    %v575 = vadd.f32 %v555, %v574
    %v576 = vrot.slane %v575, 2
    %v577 = vadd.f32 %v575, %v576
    %v578 = vrot.slane %v577, 1
    %v579 = vadd.f32 %v577, %v578
    %v580 = vld [vmem:[#allocation2] sm:$0x1]
    %582 = vset.pattern.permute.xlu0 0
    %583 = vperm.xlu0 %582, %v580
    %v584 = vpop.permute.xlu0 %583
    %v586 = vperm.slane %v584, 0
    %v587 = vadd.f32 %v561, %v586
    %v588 = vadd.f32 %v567, %v586
    %v589 = vadd.f32 %v573, %v586
    %v590 = vadd.f32 %v579, %v586
    %v595 = vrot.slane %v588, 7
    %v596 = vrot.slane %v589, 6
    %v597 = vrot.slane %v590, 5
    %vm598 = vcmask 1040384
    %v599 = vsel %vm598, %v587, %v595
    %vm600 = vcmask 1042434
    %v601 = vsel %vm600, %v596, %v597
    %vm602 = vcmask 1041408
    %v603 = vsel %vm602, %v599, %v601
    %v605 = vlaneseq
    %vm606 = vcmp.ge.s32.totalorder %v605, 0
    %vm607 = vcmp.lt.s32.totalorder %v605, 512
    %vm608 = vmand %vm606, %vm607
    %609 = vst.msk [vmem:[#allocation3] sm:$0xf] %vm608, %v603
    // Predicated region
    $region38: #{tpu_custom_call.1} parent=1 // pred_check
      _
    $region39: #{tpu_custom_call.1} parent=1 // pred_check_branch
      %611 = sbr.rel (0) target = $region41
    $region40: #{tpu_custom_call.1} parent=1 // pred_region
      %613 = vsyncadd [#allocation4], 0
      %s615 = sshll.u32 [#allocation3], 4
      %s616 = int_to_ptr.vmem [resolvable:$true] %s615
      %s617 = sshll.u32 %s9, 4
      %s618 = int_to_ptr.hbm [resolvable:$true] %s617
      %620 = dma.vmem_to_hbm [thread:$0]  %s616, 64, %s618, [#allocation4]
    $region41: #{tpu_custom_call.1} parent=1 // pred_fallthru
      _
    // Predicated region
    $region42: #{tpu_custom_call.1} parent=1 // pred_check
      _
    $region43: #{tpu_custom_call.1} parent=1 // pred_check_branch
      %622 = sbr.rel (0) target = $region45
    $region44: #{tpu_custom_call.1} parent=1 // pred_region
      %624 = dma.done [#allocation4], 64
    $region45: #{tpu_custom_call.1} parent=1 // pred_fallthru
      _
    %625 = vsyncpa [#allocation4], 1

</llo_original>
